<compile_context>
chip_gen: v6e
topology: v6e:2x2x1
jax: 0.10.0
libtpu: 0.0.40
codegen_flags: <defaults>
</compile_context>

<pallas_src>
import math
from functools import partial

import jax
import jax.numpy as jnp
from jax.experimental import pallas as pl
from jax.experimental.pallas import tpu as pltpu


# ----------------------------------------------------------------------------
# Pallas kernel: fused gather(T1) + SiLU + Linear2
# ----------------------------------------------------------------------------
def _embed_mlp_kernel(ts_ref, tbl_ref, b2_ref, o_ref, *, table_len):
    """ts_ref:  SMEM (B,) int32   (scalar-prefetched timesteps)
    tbl_ref: VMEM (L+Dp, Dp) bf16  rows [0:L] = T1 = pe@W1+b1, rows [L:] = W2
    b2_ref:  VMEM (1, Dp)   f32
    o_ref:   VMEM (B, Dp)   f32
    """
    B, Dp = o_ref.shape
    L = table_len

    # Rebuild a (B, 1) index column from the SMEM scalars (B tiny VPU selects;
    # avoids any vector DMA for the timesteps).
    rid = jax.lax.broadcasted_iota(jnp.int32, (B, 1), 0)
    ts_col = jnp.zeros((B, 1), jnp.int32)
    for i in range(B):                       # B is small & static -> unrolled
        ts_col = jnp.where(rid == i, ts_ref[i], ts_col)

    # Row gather of the folded table T1 as a one-hot matmul on the MXU.
    # One-hot entries are exactly representable in bf16, so the gathered rows
    # equal bf16(T1) exactly (f32 accumulation).
    col = jax.lax.broadcasted_iota(jnp.int32, (B, L), 1)
    onehot = (col == ts_col).astype(jnp.bfloat16)            # (B, L) of {0,1}

    t1 = tbl_ref[0:L, :]                                      # (L, Dp) bf16
    w2 = tbl_ref[L:, :]                                       # (Dp, Dp) bf16

    h = jnp.dot(onehot, t1, preferred_element_type=jnp.float32)   # (B, Dp) f32
    # SiLU in f32 (VPU mul + EUP sigmoid)
    h = h * jax.nn.sigmoid(h)
    # Linear 2 (MXU: bf16 operands, f32 accumulate) + f32 bias
    o = jnp.dot(h.astype(jnp.bfloat16), w2,
                preferred_element_type=jnp.float32) + b2_ref[...]

    o_ref[...] = o


def prog_ind_embed(timesteps, packed_tbl, b2_pad):
    """timesteps: [B] int32 (in-range by contract).
    packed_tbl: [L+Dp, Dp] bf16 (T1 rows then W2 rows).  b2_pad: [1, Dp] f32.
    Returns the lane-dense [B, Dp] f32 embedding (first latent_dim cols valid,
    remaining cols exactly zero)."""
    B = timesteps.shape[0]
    LpD, Dp = packed_tbl.shape
    L = LpD - Dp

    return pl.pallas_call(
        partial(_embed_mlp_kernel, table_len=L),
        out_shape=jax.ShapeDtypeStruct((B, Dp), jnp.float32),
        grid_spec=pltpu.PrefetchScalarGridSpec(
            num_scalar_prefetch=1,          # timesteps -> SMEM
            grid=(1,),
            in_specs=[
                # Whole-array blocks; last two dims are (8,128)-aligned or
                # equal the full array dims.  Working set < 100 KiB.
                pl.BlockSpec((LpD, Dp), lambda i, ts: (0, 0)),  # T1 | W2 (bf16)
                pl.BlockSpec((1, Dp), lambda i, ts: (0, 0)),    # b2 (f32)
            ],
            out_specs=pl.BlockSpec((B, Dp), lambda i, ts: (0, 0)),
        ),
        compiler_params=pltpu.CompilerParams(
            dimension_semantics=("arbitrary",)),
    )(timesteps, packed_tbl, b2_pad)


# ----------------------------------------------------------------------------
# Deterministic parameter / table construction
# ----------------------------------------------------------------------------
def make_sinusoidal_table(max_len, d_model):
    """Standard transformer positional-encoding table [max_len, d_model]."""
    pos = jnp.arange(max_len, dtype=jnp.float32)[:, None]
    div = jnp.exp(jnp.arange(0, d_model, 2, dtype=jnp.float32)
                  * (-math.log(10000.0) / d_model))
    pe = jnp.zeros((max_len, d_model), dtype=jnp.float32)
    pe = pe.at[:, 0::2].set(jnp.sin(pos * div))
    pe = pe.at[:, 1::2].set(jnp.cos(pos * div))
    return pe


def init_linear(key, in_f, out_f):
    """PyTorch-style uniform(-1/sqrt(in), 1/sqrt(in)); weight stored [in, out]."""
    kw, kb = jax.random.split(key)
    bound = 1.0 / math.sqrt(in_f)
    w = jax.random.uniform(kw, (in_f, out_f), jnp.float32, -bound, bound)
    b = jax.random.uniform(kb, (1, out_f), jnp.float32, -bound, bound)
    return w, b


def fold_and_pack_params(pe, w1, b1, w2, b2, d_pad):
    """One-time build of the kernel operands:
      * Fold layer 1:  T1 = pe @ W1 + b1   (f32, then zero-padded + bf16)
      * Zero-pad the feature dim to a lane-dense d_pad (exact: padded rows/cols
        contribute nothing to the un-padded outputs).
      * Pack [T1 ; W2] into one bf16 array -> a single input DMA.
    NOTE: if W1/b1 are trainable, re-run this fold after every weight update.
    """
    L, D = pe.shape
    t1 = pe @ w1 + b1                                               # (L, D) f32
    t1_p = jnp.zeros((L, d_pad), jnp.float32).at[:, :D].set(t1).astype(jnp.bfloat16)
    w2_p = jnp.zeros((d_pad, d_pad), jnp.float32).at[:D, :D].set(w2).astype(jnp.bfloat16)
    packed = jnp.concatenate([t1_p, w2_p], axis=0)                  # (L+d_pad, d_pad) bf16
    b2_p = jnp.zeros((1, d_pad), jnp.float32).at[:, :D].set(b2)
    return packed, b2_p


# ----------------------------------------------------------------------------
# Main
# ----------------------------------------------------------------------------
if __name__ == "__main__":
    latent_dim = 32     # D (module feature dim)
    max_len = 64        # positional-encoding table length
    batch = 8           # number of timesteps / prog indices
    d_pad = 128         # lane-dense padded feature dim

    key = jax.random.PRNGKey(0)
    k_ts, k_l1, k_l2 = jax.random.split(key, 3)

    pos_encoding = make_sinusoidal_table(max_len, latent_dim)   # [64, 32] f32
    w1, b1 = init_linear(k_l1, latent_dim, latent_dim)          # [32,32],[1,32]
    w2, b2 = init_linear(k_l2, latent_dim, latent_dim)

    packed_tbl, b2_pad = fold_and_pack_params(
        pos_encoding, w1, b1, w2, b2, d_pad)

    # Contract: indices are in-range.  (PyTorch raises on OOB indices; the
    # in-kernel one-hot gather would silently yield a zero row instead.)
    timesteps = jax.random.randint(k_ts, (batch,), 0, max_len, jnp.int32)

    out_pad = prog_ind_embed(timesteps, packed_tbl, b2_pad)     # (B, 128) f32
    out_pad = jax.block_until_ready(out_pad)
    assert out_pad.shape == (batch, d_pad)
    # Padded lanes are exactly zero by construction.
    assert bool(jnp.all(out_pad[:, latent_dim:] == 0.0))

    out = out_pad[:, :latent_dim]   # demo-only slice; a fused consumer would
                                    # take the padded slab directly.

    # ---- Reference 1: matched precision (bf16 T1/W2 operands, f32 accumulate)
    t1_full = pos_encoding @ w1 + b1
    t1_bf = t1_full.astype(jnp.bfloat16)
    h_m = jnp.take(t1_bf, timesteps, axis=0).astype(jnp.float32)
    h_m = h_m * jax.nn.sigmoid(h_m)
    ref_m = jnp.dot(h_m.astype(jnp.bfloat16), w2.astype(jnp.bfloat16),
                    preferred_element_type=jnp.float32) + b2
    assert jnp.allclose(out, ref_m, atol=1e-4, rtol=1e-4), (
        "max |err| vs matched-precision ref = "
        f"{float(jnp.max(jnp.abs(out - ref_m)))}")

    # ---- Reference 2: full-f32 PyTorch-equivalent forward (bf16 tolerance)
    x_f = jnp.take(pos_encoding, timesteps, axis=0)
    h_f = x_f @ w1 + b1
    h_f = h_f * jax.nn.sigmoid(h_f)
    ref_f = h_f @ w2 + b2
    assert jnp.allclose(out, ref_f, atol=5e-2, rtol=5e-2), (
        "max |err| vs f32 ref = "
        f"{float(jnp.max(jnp.abs(out - ref_f)))}")

    print("KERNEL_OK")
</pallas_src>

<mosaic_0001>
module attributes {stable_mosaic.version = 11 : i64} {
  func.func @_embed_mlp_kernel(%arg0: i32, %arg1: memref<8xi32, #tpu.memory_space<smem>>, %arg2: memref<192x128xbf16, #tpu.memory_space<vmem>>, %arg3: memref<1x128xf32, #tpu.memory_space<vmem>>, %arg4: memref<8x128xf32, #tpu.memory_space<vmem>>) attributes {dimension_semantics = [#tpu.dimension_semantics<arbitrary>], iteration_bounds = array<i64: 1>, scalar_prefetch = 1 : i64, scratch_operands = 0 : i64, tpu.core_type = #tpu.core_type<tc>, window_params = [{pipeline_mode = #tpu.pipeline_mode<synchronous>, transform_indices = @transform_0, window_bounds = array<i64: 192, 128>}, {pipeline_mode = #tpu.pipeline_mode<synchronous>, transform_indices = @transform_1, window_bounds = array<i64: 1, 128>}, {pipeline_mode = #tpu.pipeline_mode<synchronous>, transform_indices = @transform_2, window_bounds = array<i64: 8, 128>}]} {
    %0 = tpu.iota {dimensions = array<i32: 0>} : vector<8x1xi32>
    %c0_i32 = arith.constant 0 : i32
    %1 = vector.broadcast %c0_i32 : i32 to vector<8x1xi32>
    %c0_i32_0 = arith.constant 0 : i32
    %2 = vector.broadcast %c0_i32_0 : i32 to vector<8x1xi32>
    %3 = arith.cmpi eq, %0, %2 : vector<8x1xi32>
    %c0 = arith.constant 0 : index
    %4 = memref.load %arg1[%c0] : memref<8xi32, #tpu.memory_space<smem>>
    %5 = vector.broadcast %4 : i32 to vector<8x1xi32>
    %6 = arith.select %3, %5, %1 : vector<8x1xi1>, vector<8x1xi32>
    %c1_i32 = arith.constant 1 : i32
    %7 = vector.broadcast %c1_i32 : i32 to vector<8x1xi32>
    %8 = arith.cmpi eq, %0, %7 : vector<8x1xi32>
    %c1 = arith.constant 1 : index
    %9 = memref.load %arg1[%c1] : memref<8xi32, #tpu.memory_space<smem>>
    %10 = vector.broadcast %9 : i32 to vector<8x1xi32>
    %11 = arith.select %8, %10, %6 : vector<8x1xi1>, vector<8x1xi32>
    %c2_i32 = arith.constant 2 : i32
    %12 = vector.broadcast %c2_i32 : i32 to vector<8x1xi32>
    %13 = arith.cmpi eq, %0, %12 : vector<8x1xi32>
    %c2 = arith.constant 2 : index
    %14 = memref.load %arg1[%c2] : memref<8xi32, #tpu.memory_space<smem>>
    %15 = vector.broadcast %14 : i32 to vector<8x1xi32>
    %16 = arith.select %13, %15, %11 : vector<8x1xi1>, vector<8x1xi32>
    %c3_i32 = arith.constant 3 : i32
    %17 = vector.broadcast %c3_i32 : i32 to vector<8x1xi32>
    %18 = arith.cmpi eq, %0, %17 : vector<8x1xi32>
    %c3 = arith.constant 3 : index
    %19 = memref.load %arg1[%c3] : memref<8xi32, #tpu.memory_space<smem>>
    %20 = vector.broadcast %19 : i32 to vector<8x1xi32>
    %21 = arith.select %18, %20, %16 : vector<8x1xi1>, vector<8x1xi32>
    %c4_i32 = arith.constant 4 : i32
    %22 = vector.broadcast %c4_i32 : i32 to vector<8x1xi32>
    %23 = arith.cmpi eq, %0, %22 : vector<8x1xi32>
    %c4 = arith.constant 4 : index
    %24 = memref.load %arg1[%c4] : memref<8xi32, #tpu.memory_space<smem>>
    %25 = vector.broadcast %24 : i32 to vector<8x1xi32>
    %26 = arith.select %23, %25, %21 : vector<8x1xi1>, vector<8x1xi32>
    %c5_i32 = arith.constant 5 : i32
    %27 = vector.broadcast %c5_i32 : i32 to vector<8x1xi32>
    %28 = arith.cmpi eq, %0, %27 : vector<8x1xi32>
    %c5 = arith.constant 5 : index
    %29 = memref.load %arg1[%c5] : memref<8xi32, #tpu.memory_space<smem>>
    %30 = vector.broadcast %29 : i32 to vector<8x1xi32>
    %31 = arith.select %28, %30, %26 : vector<8x1xi1>, vector<8x1xi32>
    %c6_i32 = arith.constant 6 : i32
    %32 = vector.broadcast %c6_i32 : i32 to vector<8x1xi32>
    %33 = arith.cmpi eq, %0, %32 : vector<8x1xi32>
    %c6 = arith.constant 6 : index
    %34 = memref.load %arg1[%c6] : memref<8xi32, #tpu.memory_space<smem>>
    %35 = vector.broadcast %34 : i32 to vector<8x1xi32>
    %36 = arith.select %33, %35, %31 : vector<8x1xi1>, vector<8x1xi32>
    %c7_i32 = arith.constant 7 : i32
    %37 = vector.broadcast %c7_i32 : i32 to vector<8x1xi32>
    %38 = arith.cmpi eq, %0, %37 : vector<8x1xi32>
    %c7 = arith.constant 7 : index
    %39 = memref.load %arg1[%c7] : memref<8xi32, #tpu.memory_space<smem>>
    %40 = vector.broadcast %39 : i32 to vector<8x1xi32>
    %41 = arith.select %38, %40, %36 : vector<8x1xi1>, vector<8x1xi32>
    %42 = tpu.iota {dimensions = array<i32: 1>} : vector<8x64xi32>
    %43 = vector.broadcast %41 : vector<8x1xi32> to vector<8x64xi32>
    %44 = arith.cmpi eq, %42, %43 : vector<8x64xi32>
    %45 = arith.extui %44 : vector<8x64xi1> to vector<8x64xi32>
    %46 = arith.sitofp %45 : vector<8x64xi32> to vector<8x64xf32>
    %47 = arith.truncf %46 : vector<8x64xf32> to vector<8x64xbf16>
    %c0_1 = arith.constant 0 : index
    %c0_2 = arith.constant 0 : index
    %48 = vector.load %arg2[%c0_1, %c0_2] : memref<192x128xbf16, #tpu.memory_space<vmem>>, vector<64x128xbf16>
    %c64 = arith.constant 64 : index
    %c0_3 = arith.constant 0 : index
    %49 = vector.load %arg2[%c64, %c0_3] : memref<192x128xbf16, #tpu.memory_space<vmem>>, vector<128x128xbf16>
    %cst = arith.constant dense<0.000000e+00> : vector<8x128xf32>
    %50 = tpu.matmul %47, %48, %cst {dimension_numbers = #tpu.dot_dimension_numbers<[1], [0], [0], [1], [0, 0, 1, 1], [], []>} : vector<8x64xbf16>, vector<64x128xbf16>, vector<8x128xf32> -> vector<8x128xf32>
    %51 = arith.negf %50 : vector<8x128xf32>
    %52 = math.exp %51 : vector<8x128xf32>
    %cst_4 = arith.constant 1.000000e+00 : f32
    %53 = vector.broadcast %cst_4 : f32 to vector<8x128xf32>
    %54 = arith.addf %53, %52 : vector<8x128xf32>
    %55 = arith.divf %53, %54 : vector<8x128xf32>
    %56 = arith.mulf %50, %55 : vector<8x128xf32>
    %57 = arith.truncf %56 : vector<8x128xf32> to vector<8x128xbf16>
    %cst_5 = arith.constant dense<0.000000e+00> : vector<8x128xf32>
    %58 = tpu.matmul %57, %49, %cst_5 {dimension_numbers = #tpu.dot_dimension_numbers<[1], [0], [0], [1], [0, 0, 1, 1], [], []>} : vector<8x128xbf16>, vector<128x128xbf16>, vector<8x128xf32> -> vector<8x128xf32>
    %c0_6 = arith.constant 0 : index
    %c0_7 = arith.constant 0 : index
    %59 = vector.load %arg3[%c0_6, %c0_7] : memref<1x128xf32, #tpu.memory_space<vmem>>, vector<1x128xf32>
    %60 = vector.broadcast %59 : vector<1x128xf32> to vector<8x128xf32>
    %61 = arith.addf %58, %60 : vector<8x128xf32>
    %c0_8 = arith.constant 0 : index
    %c0_9 = arith.constant 0 : index
    %62 = vector.load %arg4[%c0_8, %c0_9] : memref<8x128xf32, #tpu.memory_space<vmem>>, vector<8x128xf32>
    tpu.vector_store %arg4[%c0_8, %c0_9], %61 {strides = array<i32>} : memref<8x128xf32, #tpu.memory_space<vmem>>, vector<8x128xf32>,
    return
  }
  func.func @transform_0(%arg0: i32, %arg1: memref<8xi32, #tpu.memory_space<smem>>) -> (i32, i32) {
    %c0_i32 = arith.constant 0 : i32
    %c0_i32_0 = arith.constant 0 : i32
    %c0_i32_1 = arith.constant 0 : i32
    return %c0_i32, %c0_i32_0 : i32, i32
  }
  func.func @transform_1(%arg0: i32, %arg1: memref<8xi32, #tpu.memory_space<smem>>) -> (i32, i32) {
    %c0_i32 = arith.constant 0 : i32
    %c0_i32_0 = arith.constant 0 : i32
    %c0_i32_1 = arith.constant 0 : i32
    return %c0_i32, %c0_i32_0 : i32, i32
  }
  func.func @transform_2(%arg0: i32, %arg1: memref<8xi32, #tpu.memory_space<smem>>) -> (i32, i32) {
    %c0_i32 = arith.constant 0 : i32
    %c0_i32_0 = arith.constant 0 : i32
    %c0_i32_1 = arith.constant 0 : i32
    return %c0_i32, %c0_i32_0 : i32, i32
  }
}

</mosaic_0001>

<llo_original>
// kernel: tpu_custom_call.1
$region0: #{tpu_custom_call.1}
  #allocation0 [shape = 'u32[]', space=smem, size = 0x4, offset = 0x4, fixed_abs, tag = 'smem constant byte address 0x4 - core index']
  #allocation1 [shape = 'u32[144,128]{1,0:T(1,128)}', space=vmem, size = 0x12000, scoped, tag = 'internal scratch']
  #allocation2 [shape = 's32[1]{0}', space=sflag, size = 0x4, scoped, tag = 'scoped memory for tpu_custom_call.1']
  #allocation3 [shape = 'u8[512]{0}', space=smem, size = 0x200, scoped, tag = 'prefetched SMEM operand 0']
  %s0 = inlined_call_operand.hbm [shape: s32[8], index: 0, kind: input, shape index: {}]
  %s1 = inlined_call_operand.hbm [shape: bf16[192,128], index: 1, kind: input, shape index: {}]
  %s2 = inlined_call_operand.vmem [shape: f32[1,128], index: 2, kind: input, shape index: {}]
  %s3 = inlined_call_operand.hbm [shape: f32[8,128], index: 3, kind: output, shape index: {}]
  %s4 = sld [smem:[#allocation0]]
  $region22: #{tpu_custom_call.1} parent=0
    _
  %s6 = ssub.s32 1, %s4
  %s7 = scalar_select 0, %s6, %s4
  %9 = dma.hbm_to_smem %s0, 16, [#allocation3], [#allocation2]
  %10 = dma.done [#allocation2], 16
  %11 = sfence
  $region1: #{tpu_custom_call.1} parent=0
    #allocation4 [shape = 'u8[49152]{0}', space=vmem, size = 0xc000, scoped, tag = 'input window, operand 1, single buffered']
    #allocation5 [shape = 's32[1]{0}', space=sflag, size = 0x4, scoped, tag = 'scoped memory for tpu_custom_call.1']
    #allocation6 [shape = 's32[1]{0}', space=sflag, size = 0x4, scoped, tag = 'scoped memory for tpu_custom_call.1']
    #allocation7 [shape = 'u8[4096]{0}', space=vmem, size = 0x1000, scoped, tag = 'output window, operand 0, single buffered']
    %12 = vsyncpa [#allocation5], 0
    %13 = vsyncpa [#allocation6], 0
    // Predicated region
    $region2: #{tpu_custom_call.1} parent=1 // pred_check
      _
    $region3: #{tpu_custom_call.1} parent=1 // pred_check_branch
      %15 = sbr.rel (0) target = $region5
    $region4: #{tpu_custom_call.1} parent=1 // pred_region
      %s17 = ssub.s32 1536, 1536
      %18 = vsyncadd [#allocation5], %s17
      %s19 = sshll.u32 [#allocation4], 4
      %s20 = int_to_ptr.vmem [resolvable:$true] %s19
      %25 = dma.hbm_to_vmem [thread:$0]  %s1, 1536, %s20, [#allocation5], 64, 64, 4
    $region5: #{tpu_custom_call.1} parent=1 // pred_fallthru
      _
    // Predicated region
    $region6: #{tpu_custom_call.1} parent=1 // pred_check
      _
    $region7: #{tpu_custom_call.1} parent=1 // pred_check_branch
      %27 = sbr.rel (0) target = $region9
    $region8: #{tpu_custom_call.1} parent=1 // pred_region
      _
    $region9: #{tpu_custom_call.1} parent=1 // pred_fallthru
      _
    // Predicated region
    $region10: #{tpu_custom_call.1} parent=1 // pred_check
      _
    $region11: #{tpu_custom_call.1} parent=1 // pred_check_branch
      %29 = sbr.rel (0) target = $region13
    $region12: #{tpu_custom_call.1} parent=1 // pred_region
      %30 = dma.done [#allocation5], 1536
    $region13: #{tpu_custom_call.1} parent=1 // pred_fallthru
      _
    %v32 = vlaneseq
    %v33 = vshrl.u32 %v32, 7
    %vm34 = vcmp.eq.s32.totalorder %v33, 0
    %s35 = sld [smem:[#allocation3]]
    %v36 = vstv %s35
    %v37 = vsel %vm34, %v36, 0
    %vm38 = vcmp.eq.s32.totalorder %v33, 1
    %s39 = sld [smem:[#allocation3 + $0x1]]
    %v40 = vstv %s39
    %v41 = vsel %vm38, %v40, %v37
    %vm42 = vcmp.eq.s32.totalorder %v33, 2
    %s43 = sld [smem:[#allocation3 + $0x2]]
    %v44 = vstv %s43
    %v45 = vsel %vm42, %v44, %v41
    %vm46 = vcmp.eq.s32.totalorder %v33, 3
    %s47 = sld [smem:[#allocation3 + $0x3]]
    %v48 = vstv %s47
    %v49 = vsel %vm46, %v48, %v45
    %vm50 = vcmp.eq.s32.totalorder %v33, 4
    %s51 = sld [smem:[#allocation3 + $0x4]]
    %v52 = vstv %s51
    %v53 = vsel %vm50, %v52, %v49
    %vm54 = vcmp.eq.s32.totalorder %v33, 5
    %s55 = sld [smem:[#allocation3 + $0x5]]
    %v56 = vstv %s55
    %v57 = vsel %vm54, %v56, %v53
    %vm58 = vcmp.eq.s32.totalorder %v33, 6
    %s59 = sld [smem:[#allocation3 + $0x6]]
    %v60 = vstv %s59
    %v61 = vsel %vm58, %v60, %v57
    %vm62 = vcmp.eq.s32.totalorder %v33, 7
    %s63 = sld [smem:[#allocation3 + $0x7]]
    %v64 = vstv %s63
    %v65 = vsel %vm62, %v64, %v61
    %v66 = vlaneseq
    %v67 = vand.u32 %v66, 127
    %vm68 = vcmp.eq.s32.totalorder %v67, %v65
    %v69 = vsel %vm68, 1, 0
    %v70 = vcvt.s32.f32 %v69
    %v71 = vpack.c.bf16 %v70, %v70
    %v72 = vld [vmem:[#allocation4] sm:$0xf]
    %v73 = vld [vmem:[#allocation4 + $0x4] sm:$0xf]
    %v74 = vld [vmem:[#allocation4 + $0x8] sm:$0xf]
    %v75 = vld [vmem:[#allocation4 + $0xc] sm:$0xf]
    %v76 = vld [vmem:[#allocation4 + $0x10] sm:$0xf]
    %v77 = vld [vmem:[#allocation4 + $0x14] sm:$0xf]
    %v78 = vld [vmem:[#allocation4 + $0x18] sm:$0xf]
    %v79 = vld [vmem:[#allocation4 + $0x1c] sm:$0xf]
    %v80 = vld [vmem:[#allocation4 + $0x20] sm:$0xf]
    %v81 = vld [vmem:[#allocation4 + $0x24] sm:$0xf]
    %v82 = vld [vmem:[#allocation4 + $0x28] sm:$0xf]
    %v83 = vld [vmem:[#allocation4 + $0x2c] sm:$0xf]
    %v84 = vld [vmem:[#allocation4 + $0x30] sm:$0xf]
    %v85 = vld [vmem:[#allocation4 + $0x34] sm:$0xf]
    %v86 = vld [vmem:[#allocation4 + $0x38] sm:$0xf]
    %v87 = vld [vmem:[#allocation4 + $0x3c] sm:$0xf]
    %v88 = vld [vmem:[#allocation4 + $0x40] sm:$0xf]
    %v89 = vld [vmem:[#allocation4 + $0x44] sm:$0xf]
    %v90 = vld [vmem:[#allocation4 + $0x48] sm:$0xf]
    %v91 = vld [vmem:[#allocation4 + $0x4c] sm:$0xf]
    %v92 = vld [vmem:[#allocation4 + $0x50] sm:$0xf]
    %v93 = vld [vmem:[#allocation4 + $0x54] sm:$0xf]
    %v94 = vld [vmem:[#allocation4 + $0x58] sm:$0xf]
    %v95 = vld [vmem:[#allocation4 + $0x5c] sm:$0xf]
    %v104 = vunpack.c.l.b16 %v72
    %v105 = vunpack.c.l.b16 %v73
    %v106 = vunpack.c.l.b16 %v74
    %v107 = vunpack.c.l.b16 %v75
    %v108 = vunpack.c.l.b16 %v76
    %v109 = vunpack.c.l.b16 %v77
    %v110 = vunpack.c.l.b16 %v78
    %v111 = vunpack.c.l.b16 %v79
    %v112 = vpack.c.b16 %v105, %v104
    %v113 = vpack.c.b16 %v107, %v106
    %v114 = vpack.c.b16 %v109, %v108
    %v115 = vpack.c.b16 %v111, %v110
    %vm120 = vcmask 523264
    %v122 = vsel %vm120, %v71, 0
    %124 = vmatprep.subr.bf16.mxu0 0
    %125 = vmatpush1.bf16.msra.mxu0 0
    %126 = vmatprep.subr.bf16.mxu0 0
    %127 = vmatpush1.bf16.msra.mxu0 0
    %128 = vmatprep.subr.bf16.mxu0 0
    %129 = vmatpush1.bf16.msra.mxu0 0
    %130 = vmatprep.subr.bf16.mxu0 0
    %131 = vmatpush1.bf16.msra.mxu0 0
    %132 = vmatprep.subr.bf16.mxu0 0
    %133 = vmatpush1.bf16.msra.mxu0 %v115
    %134 = vmatprep.subr.bf16.mxu0 0
    %135 = vmatpush1.bf16.msra.mxu0 %v114
    %136 = vmatprep.subr.bf16.mxu0 0
    %137 = vmatpush1.bf16.msra.mxu0 %v113
    %138 = vmatprep.subr.bf16.mxu0 0
    %139 = vmatpush1.bf16.msra.mxu0 %v112
    %140 = vmatprep.subr.bf16.mxu0 0
    %141 = vmatpush2.bf16.msra.mxu0 0
    %142 = vmatprep.subr.bf16.mxu0 0
    %143 = vmatpush2.bf16.msra.mxu0 0
    %144 = vmatprep.subr.bf16.mxu0 0
    %145 = vmatpush2.bf16.msra.mxu0 0
    %146 = vmatprep.subr.bf16.mxu0 0
    %147 = vmatpush2.bf16.msra.mxu0 0
    %148 = vmatprep.subr.bf16.mxu0 0
    %149 = vmatpush2.bf16.msra.mxu0 0
    %150 = vmatprep.subr.bf16.mxu0 0
    %151 = vmatpush2.bf16.msra.mxu0 0
    %152 = vmatprep.subr.bf16.mxu0 0
    %153 = vmatpush2.bf16.msra.mxu0 0
    %154 = vmatprep.subr.bf16.mxu0 0
    %155 = vmatpush2.bf16.msra.mxu0 0
    %156 = vmatprep.mubr.bf16.mxu0 0
    %157 = vmatmul.mubr.bf16.gmra.mxu0 %v122
    %v158 = vpop.f32.mrf.mxu0
    %v159 = vadd.f32 0.0, %v158
    %v160 = vpop.f32.mrf.mxu0
    %v161 = vpop.f32.mrf.mxu0
    %v162 = vpop.f32.mrf.mxu0
    %163 = vdwg.mxu0
    %v164 = vxor.u32 %v159, 2147483648
    %v165 = vmul.f32 %v164, 1.442695
    %v166 = vpow.pop %v165
    %v167 = vadd.f32 %v166, 1.0
    %v168 = vrcp.pop %v167
    %v169 = vmul.f32 1.0, %v168
    %v170 = vmul.f32 %v159, %v169
    %v171 = vpack.c.bf16 %v170, %v170
    %v172 = vld [vmem:[%s2] sm:$0x1]
    %v174 = vlaneseq
    %v175 = vshrl.u32 %v174, 7
    %v176 = vsub.s32 0, %v175
    %v177 = vrot.slane %v172, %v176
    %v195 = vunpack.c.l.b16 %v80
    %v196 = vunpack.c.l.b16 %v81
    %v197 = vunpack.c.l.b16 %v82
    %v198 = vunpack.c.l.b16 %v83
    %v199 = vunpack.c.l.b16 %v84
    %v200 = vunpack.c.l.b16 %v85
    %v201 = vunpack.c.l.b16 %v86
    %v202 = vunpack.c.l.b16 %v87
    %v203 = vunpack.c.l.b16 %v88
    %v204 = vunpack.c.l.b16 %v89
    %v205 = vunpack.c.l.b16 %v90
    %v206 = vunpack.c.l.b16 %v91
    %v207 = vunpack.c.l.b16 %v92
    %v208 = vunpack.c.l.b16 %v93
    %v209 = vunpack.c.l.b16 %v94
    %v210 = vunpack.c.l.b16 %v95
    %v211 = vpack.c.b16 %v196, %v195
    %v212 = vpack.c.b16 %v198, %v197
    %v213 = vpack.c.b16 %v200, %v199
    %v214 = vpack.c.b16 %v202, %v201
    %v215 = vpack.c.b16 %v204, %v203
    %v216 = vpack.c.b16 %v206, %v205
    %v217 = vpack.c.b16 %v208, %v207
    %v218 = vpack.c.b16 %v210, %v209
    %227 = vmatprep.subr.bf16.mxu0 0
    %228 = vmatpush1.bf16.msra.mxu0 %v218
    %229 = vmatprep.subr.bf16.mxu0 0
    %230 = vmatpush1.bf16.msra.mxu0 %v217
    %231 = vmatprep.subr.bf16.mxu0 0
    %232 = vmatpush1.bf16.msra.mxu0 %v216
    %233 = vmatprep.subr.bf16.mxu0 0
    %234 = vmatpush1.bf16.msra.mxu0 %v215
    %235 = vmatprep.subr.bf16.mxu0 0
    %236 = vmatpush1.bf16.msra.mxu0 %v214
    %237 = vmatprep.subr.bf16.mxu0 0
    %238 = vmatpush1.bf16.msra.mxu0 %v213
    %239 = vmatprep.subr.bf16.mxu0 0
    %240 = vmatpush1.bf16.msra.mxu0 %v212
    %241 = vmatprep.subr.bf16.mxu0 0
    %242 = vmatpush1.bf16.msra.mxu0 %v211
    %243 = vmatprep.subr.bf16.mxu0 0
    %244 = vmatpush2.bf16.msra.mxu0 0
    %245 = vmatprep.subr.bf16.mxu0 0
    %246 = vmatpush2.bf16.msra.mxu0 0
    %247 = vmatprep.subr.bf16.mxu0 0
    %248 = vmatpush2.bf16.msra.mxu0 0
    %249 = vmatprep.subr.bf16.mxu0 0
    %250 = vmatpush2.bf16.msra.mxu0 0
    %251 = vmatprep.subr.bf16.mxu0 0
    %252 = vmatpush2.bf16.msra.mxu0 0
    %253 = vmatprep.subr.bf16.mxu0 0
    %254 = vmatpush2.bf16.msra.mxu0 0
    %255 = vmatprep.subr.bf16.mxu0 0
    %256 = vmatpush2.bf16.msra.mxu0 0
    %257 = vmatprep.subr.bf16.mxu0 0
    %258 = vmatpush2.bf16.msra.mxu0 0
    %259 = vmatprep.mubr.bf16.mxu0 0
    %260 = vmatmul.mubr.bf16.gmra.mxu0 %v171
    %v261 = vpop.f32.mrf.mxu0
    %v262 = vadd.f32 %v177, %v261
    %v263 = vpop.f32.mrf.mxu0
    %v264 = vpop.f32.mrf.mxu0
    %v265 = vpop.f32.mrf.mxu0
    %266 = vdwg.mxu0
    %267 = vst [vmem:[#allocation7] sm:$0xff] %v262
    // Predicated region
    $region14: #{tpu_custom_call.1} parent=1 // pred_check
      _
    $region15: #{tpu_custom_call.1} parent=1 // pred_check_branch
      %269 = sbr.rel (0) target = $region17
    $region16: #{tpu_custom_call.1} parent=1 // pred_region
      %s271 = ssub.s32 128, 128
      %272 = vsyncadd [#allocation6], %s271
      %s274 = sshll.u32 [#allocation7], 4
      %s275 = int_to_ptr.vmem [resolvable:$true] %s274
      %277 = dma.vmem_to_hbm [thread:$0]  %s275, 128, %s3, [#allocation6]
    $region17: #{tpu_custom_call.1} parent=1 // pred_fallthru
      _
    // Predicated region
    $region18: #{tpu_custom_call.1} parent=1 // pred_check
      _
    $region19: #{tpu_custom_call.1} parent=1 // pred_check_branch
      %279 = sbr.rel (0) target = $region21
    $region20: #{tpu_custom_call.1} parent=1 // pred_region
      %280 = dma.done [#allocation6], 128
    $region21: #{tpu_custom_call.1} parent=1 // pred_fallthru
      _
    %281 = vsyncpa [#allocation5], 1
    %282 = vsyncpa [#allocation6], 1

</llo_original>
